<compile_context>
chip_gen: v6e
topology: v6e:2x2x1
jax: 0.10.0
libtpu: 0.0.40
codegen_flags: <defaults>
</compile_context>

<pallas_src>
import math

import jax
import jax.numpy as jnp
from jax.experimental import pallas as pl
from jax.experimental.pallas import tpu as pltpu


def _round_up(n, m):
    return ((n + m - 1) // m) * m


# ----------------------------- Pallas kernels ------------------------------ #

def _router_kernel(x_ref, w_ref, b_ref, o_ref):
    # Fused router: one f32 matmul produces [logits | noise_logits] (lane-padded).
    o_ref[...] = (
        jnp.dot(x_ref[...], w_ref[...], preferred_element_type=jnp.float32)
        + b_ref[...]
    )


def router_logits(flat_x, wrn, brn, *, tile_n):
    """flat_x: [Np, Cp] f32, wrn: [Cp, EP] f32, brn: [1, EP] f32 -> [Np, EP] f32."""
    Np, Cp = flat_x.shape
    EP = wrn.shape[1]
    grid = (Np // tile_n,)
    return pl.pallas_call(
        _router_kernel,
        out_shape=jax.ShapeDtypeStruct((Np, EP), jnp.float32),
        grid_spec=pltpu.PrefetchScalarGridSpec(
            num_scalar_prefetch=0,
            grid=grid,
            in_specs=[
                pl.BlockSpec((tile_n, Cp), lambda i: (i, 0)),
                pl.BlockSpec((Cp, EP), lambda i: (0, 0)),   # constant -> DMA'd once
                pl.BlockSpec((1, EP), lambda i: (0, 0)),    # constant -> DMA'd once
            ],
            out_specs=pl.BlockSpec((tile_n, EP), lambda i: (i, 0)),
        ),
        compiler_params=pltpu.CompilerParams(
            dimension_semantics=("parallel",),
        ),
    )(flat_x, wrn, brn)


def _expert_kernel(x_ref, w1_ref, b1_ref, w2_ref, b2_ref, g_ref, o_ref):
    # Grid = (expert e, token-chunk m).  Leading expert dim is squeezed out.
    # x_ref:  (tile_m, Cp)  bf16  -- this expert's gathered tokens (one chunk)
    # w1_ref: (Cp, Hp)      bf16  -- streamed once per expert
    # b1_ref: (1, Hp)       f32
    # w2_ref: (Hp, Cp)      bf16  -- streamed once per expert
    # b2_ref: (1, Cp)       f32
    # g_ref:  (tile_m, 1)   f32   -- gating prob * slot-valid mask
    # o_ref:  (tile_m, Cp)  bf16
    h = jnp.dot(x_ref[...], w1_ref[...],
                preferred_element_type=jnp.float32) + b1_ref[...]
    h = h * jax.nn.sigmoid(h)                 # SiLU in f32 (v5e-safe)
    y = jnp.dot(h.astype(jnp.bfloat16), w2_ref[...],
                preferred_element_type=jnp.float32) + b2_ref[...]
    o_ref[...] = (y * g_ref[...]).astype(o_ref.dtype)


def _expert_vmem_bytes(tile_m, Cp, Hp):
    bf16, f32 = 2, 4
    x_t = 2 * tile_m * Cp * bf16                       # double-buffered x tile
    o_t = 2 * tile_m * Cp * bf16                       # double-buffered out tile
    w_t = 2 * (Cp * Hp * bf16 + Hp * f32 + Hp * Cp * bf16 + Cp * f32)
    g_t = 2 * tile_m * 128 * f32                       # gate tile (lane-padded)
    h_t = 2 * tile_m * Hp * f32                        # (tile_m, Hp) intermediate
    return x_t + o_t + w_t + g_t + h_t


def moe_experts(x_g, w1, b1, w2, b2, gate, *, tile_m):
    """Capacity-packed expert compute.

    x_g:  [E, Capp, Cp] bf16   gathered tokens per expert slot
    w1:   [E, Cp, Hp]   bf16   (streamed once per expert by the grid)
    b1:   [E, 1, Hp]    f32
    w2:   [E, Hp, Cp]   bf16
    b2:   [E, 1, Cp]    f32
    gate: [E, Capp, 1]  f32    gating prob * slot-valid mask
    ->    [E, Capp, Cp] bf16   gated expert outputs
    """
    E, Capp, Cp = x_g.shape
    Hp = w1.shape[2]
    grid = (E, Capp // tile_m)

    need = _expert_vmem_bytes(tile_m, Cp, Hp)
    # generation-safe budget: generous margin, capped below v7x's 64 MiB/TC.
    vmem_limit = int(min(max(4 * need, 16 * 1024 * 1024), 48 * 1024 * 1024))

    return pl.pallas_call(
        _expert_kernel,
        out_shape=jax.ShapeDtypeStruct((E, Capp, Cp), jnp.bfloat16),
        grid_spec=pltpu.PrefetchScalarGridSpec(
            num_scalar_prefetch=0,
            grid=grid,
            in_specs=[
                pl.BlockSpec((None, tile_m, Cp), lambda e, m: (e, m, 0)),
                pl.BlockSpec((None, Cp, Hp), lambda e, m: (e, 0, 0)),
                pl.BlockSpec((None, 1, Hp), lambda e, m: (e, 0, 0)),
                pl.BlockSpec((None, Hp, Cp), lambda e, m: (e, 0, 0)),
                pl.BlockSpec((None, 1, Cp), lambda e, m: (e, 0, 0)),
                pl.BlockSpec((None, tile_m, 1), lambda e, m: (e, m, 0)),
            ],
            out_specs=pl.BlockSpec((None, tile_m, Cp), lambda e, m: (e, m, 0)),
        ),
        compiler_params=pltpu.CompilerParams(
            dimension_semantics=("parallel", "parallel"),
            vmem_limit_bytes=vmem_limit,
        ),
    )(x_g, w1, b1, w2, b2, gate)


# ------------------------------ host-side glue ------------------------------ #

def prepare_params(params, config):
    """One-time padding / bf16 casting of router + expert weights."""
    C = config["n_embed"]
    E = config["num_experts"]
    H = 4 * C
    Cp = _round_up(C, 128)
    Hp = _round_up(H, 128)
    EP = _round_up(2 * E, 128)          # fused router output lanes

    wrn = jnp.zeros((Cp, EP), jnp.float32)
    wrn = wrn.at[:C, :E].set(params["wr"]).at[:C, E:2 * E].set(params["wn"])
    brn = jnp.zeros((1, EP), jnp.float32)
    brn = brn.at[:, :E].set(params["br"]).at[:, E:2 * E].set(params["bn"])

    w1 = jnp.zeros((E, Cp, Hp), jnp.float32).at[:, :C, :H].set(
        params["w1"]).astype(jnp.bfloat16)
    w2 = jnp.zeros((E, Hp, Cp), jnp.float32).at[:, :H, :C].set(
        params["w2"]).astype(jnp.bfloat16)
    b1 = jnp.zeros((E, 1, Hp), jnp.float32).at[:, :, :H].set(params["b1"])
    b2 = jnp.zeros((E, 1, Cp), jnp.float32).at[:, :, :C].set(params["b2"])

    return dict(wrn=wrn, brn=brn, w1=w1, b1=b1, w2=w2, b2=b2,
                Cp=Cp, Hp=Hp, EP=EP)


def sparse_moe_forward(prepared, x, noise_key, config, *,
                       tile_m=256, router_tile=256):
    B, T, C = x.shape
    E = config["num_experts"]
    K = config["top_k"]
    Cp, Hp = prepared["Cp"], prepared["Hp"]
    flat_x = x.reshape(-1, C)
    N = flat_x.shape[0]

    # ---- NoisyTopkRouter (fused wr|wn matmul in Pallas, f32 for exact routing) ----
    rt = min(router_tile, _round_up(N, 8))
    Np = _round_up(N, rt)
    x_pad = jnp.zeros((Np, Cp), jnp.float32).at[:N, :C].set(flat_x)
    both = router_logits(x_pad, prepared["wrn"], prepared["brn"], tile_n=rt)[:N]
    logits = both[:, :E]
    noise_logits = both[:, E:2 * E]

    noise = jax.random.normal(noise_key, logits.shape, dtype=logits.dtype)
    noisy = logits + noise * jax.nn.softplus(noise_logits)
    topk_vals, topk_idx = jax.lax.top_k(noisy, K)
    sparse = jnp.full_like(noisy, -jnp.inf)
    sparse = sparse.at[jnp.arange(N)[:, None], topk_idx].set(topk_vals)
    gating = jax.nn.softmax(sparse, axis=-1)                     # [N, E]

    # ---- capacity limiting + dispatch plan (first `capacity` tokens, flat order) ----
    capacity = int(B * T * K / E * config["capacity_factor"])
    if capacity <= 0:
        return jnp.zeros_like(x)
    expert_mask = (topk_idx[:, :, None] == jnp.arange(E)[None, None, :]).any(axis=1)
    em_i = expert_mask.astype(jnp.int32)
    rank = jnp.cumsum(em_i, axis=0) - em_i                        # exclusive cumsum
    keep = expert_mask & (rank < capacity)

    # slot c of expert e <- index of the c-th kept token (scatter via dump column)
    safe_slot = jnp.where(keep, rank, capacity)
    e_ids = jnp.broadcast_to(jnp.arange(E)[None, :], (N, E))
    n_ids = jnp.broadcast_to(jnp.arange(N)[:, None], (N, E))
    dispatch = jnp.zeros((E, capacity + 1), jnp.int32).at[e_ids, safe_slot].set(n_ids)
    dispatch = dispatch[:, :capacity]                             # (E, capacity)
    count = keep.sum(axis=0)                                      # kept tokens / expert
    slot_valid = (jnp.arange(capacity)[None, :] < count[:, None]).astype(jnp.float32)
    gate_slot = gating[dispatch, jnp.arange(E)[:, None]] * slot_valid

    # pad capacity to an MXU-friendly chunk size
    tile_m = min(tile_m, _round_up(capacity, 8))
    Capp = _round_up(capacity, tile_m)
    dispatch_p = jnp.zeros((E, Capp), jnp.int32).at[:, :capacity].set(dispatch)
    gate_p = jnp.zeros((E, Capp, 1), jnp.float32).at[:, :capacity, 0].set(gate_slot)

    # ---- dispatch: gather tokens into per-expert capacity slots (bf16) ----
    x_cp = jnp.zeros((N, Cp), jnp.bfloat16).at[:, :C].set(flat_x.astype(jnp.bfloat16))
    x_g = x_cp[dispatch_p.reshape(-1)].reshape(E, Capp, Cp)

    # ---- expert compute (Pallas, bf16 MXU, gating applied in-kernel) ----
    y_g = moe_experts(x_g, prepared["w1"], prepared["b1"],
                      prepared["w2"], prepared["b2"], gate_p, tile_m=tile_m)

    # ---- combine: scatter-add gated outputs back to token order (f32) ----
    updates = jnp.zeros((N, Cp), jnp.float32)
    updates = updates.at[dispatch_p.reshape(-1)].add(
        y_g.reshape(E * Capp, Cp).astype(jnp.float32))
    # TODO(synk): nn.Dropout with p>0 not implemented; eval-mode (p=0) identity.
    return updates[:, :C].reshape(B, T, C)


def sparse_moe_reference(params, x, noise_key, config):
    """Pure-JAX f32 reference mirroring the PyTorch forward (dense-masked form)."""
    B, T, C = x.shape
    E, K = config["num_experts"], config["top_k"]
    flat_x = x.reshape(-1, C)
    N = flat_x.shape[0]
    logits = flat_x @ params["wr"] + params["br"]
    noise_logits = flat_x @ params["wn"] + params["bn"]
    noise = jax.random.normal(noise_key, logits.shape, dtype=logits.dtype)
    noisy = logits + noise * jax.nn.softplus(noise_logits)
    topk_vals, topk_idx = jax.lax.top_k(noisy, K)
    sparse = jnp.full_like(noisy, -jnp.inf)
    sparse = sparse.at[jnp.arange(N)[:, None], topk_idx].set(topk_vals)
    gating = jax.nn.softmax(sparse, axis=-1)
    capacity = int(B * T * K / E * config["capacity_factor"])
    expert_mask = (topk_idx[:, :, None] == jnp.arange(E)[None, None, :]).any(axis=1)
    em_i = expert_mask.astype(jnp.int32)
    rank = jnp.cumsum(em_i, axis=0) - em_i
    keep = expert_mask & (rank < capacity)
    combine = gating * keep.astype(gating.dtype)
    out = jnp.zeros_like(flat_x)
    for e in range(E):
        h = flat_x @ params["w1"][e] + params["b1"][e]
        h = h * jax.nn.sigmoid(h)
        y = h @ params["w2"][e] + params["b2"][e]
        out = out + y * combine[:, e:e + 1]
    return out.reshape(B, T, C)


def init_params(key, n_embed, num_experts):
    C, E, H = n_embed, num_experts, 4 * n_embed
    ks = jax.random.split(key, 8)

    def u(k, shape, fan_in):
        bound = 1.0 / math.sqrt(fan_in)
        return jax.random.uniform(k, shape, jnp.float32, -bound, bound)

    return {
        "wr": u(ks[0], (C, E), C), "br": u(ks[1], (1, E), C),
        "wn": u(ks[2], (C, E), C), "bn": u(ks[3], (1, E), C),
        "w1": u(ks[4], (E, C, H), C), "b1": u(ks[5], (E, 1, H), C),
        "w2": u(ks[6], (E, H, C), H), "b2": u(ks[7], (E, 1, C), H),
    }


if __name__ == "__main__":
    config = dict(
        n_embed=32, num_experts=4, top_k=2, capacity_factor=1.0,
        bias=True, dropout=0.0,
    )
    B, T, C = 2, 64, config["n_embed"]

    root = jax.random.PRNGKey(0)
    k_param, k_x, k_noise = jax.random.split(root, 3)
    params = init_params(k_param, config["n_embed"], config["num_experts"])
    prepared = prepare_params(params, config)      # one-time weight prep (hoisted)
    x = jax.random.normal(k_x, (B, T, C), dtype=jnp.float32)

    out = sparse_moe_forward(prepared, x, k_noise, config)
    out = jax.block_until_ready(out)

    ref = jax.block_until_ready(sparse_moe_reference(params, x, k_noise, config))
    assert out.shape == (B, T, C)
    # bf16 MXU operands / bf16 expert outputs vs f32 reference -> relaxed tolerance.
    assert jnp.allclose(out, ref, atol=3e-2, rtol=3e-2), "mismatch vs reference"
    print("KERNEL_OK")
</pallas_src>

<mosaic_0001>
module attributes {stable_mosaic.version = 11 : i64} {
  func.func @_router_kernel(%arg0: i32, %arg1: memref<128x128xf32, #tpu.memory_space<vmem>>, %arg2: memref<128x128xf32, #tpu.memory_space<vmem>>, %arg3: memref<1x128xf32, #tpu.memory_space<vmem>>, %arg4: memref<128x128xf32, #tpu.memory_space<vmem>>) attributes {dimension_semantics = [#tpu.dimension_semantics<parallel>], iteration_bounds = array<i64: 1>, scalar_prefetch = 0 : i64, scratch_operands = 0 : i64, tpu.core_type = #tpu.core_type<tc>, window_params = [{transform_indices = @transform_0, window_bounds = array<i64: 128, 128>}, {pipeline_mode = #tpu.pipeline_mode<synchronous>, transform_indices = @transform_1, window_bounds = array<i64: 128, 128>}, {pipeline_mode = #tpu.pipeline_mode<synchronous>, transform_indices = @transform_2, window_bounds = array<i64: 1, 128>}, {transform_indices = @transform_3, window_bounds = array<i64: 128, 128>}]} {
    %c0 = arith.constant 0 : index
    %c0_0 = arith.constant 0 : index
    %0 = vector.load %arg1[%c0, %c0_0] : memref<128x128xf32, #tpu.memory_space<vmem>>, vector<128x128xf32>
    %c0_1 = arith.constant 0 : index
    %c0_2 = arith.constant 0 : index
    %1 = vector.load %arg2[%c0_1, %c0_2] : memref<128x128xf32, #tpu.memory_space<vmem>>, vector<128x128xf32>
    %cst = arith.constant dense<0.000000e+00> : vector<128x128xf32>
    %2 = tpu.matmul %0, %1, %cst {dimension_numbers = #tpu.dot_dimension_numbers<[1], [0], [0], [1], [0, 0, 1, 1], [], []>} : vector<128x128xf32>, vector<128x128xf32>, vector<128x128xf32> -> vector<128x128xf32>
    %c0_3 = arith.constant 0 : index
    %c0_4 = arith.constant 0 : index
    %3 = vector.load %arg3[%c0_3, %c0_4] : memref<1x128xf32, #tpu.memory_space<vmem>>, vector<1x128xf32>
    %4 = vector.broadcast %3 : vector<1x128xf32> to vector<128x128xf32>
    %5 = arith.addf %2, %4 : vector<128x128xf32>
    %c0_5 = arith.constant 0 : index
    %c0_6 = arith.constant 0 : index
    %6 = vector.load %arg4[%c0_5, %c0_6] : memref<128x128xf32, #tpu.memory_space<vmem>>, vector<128x128xf32>
    tpu.vector_store %arg4[%c0_5, %c0_6], %5 {strides = array<i32>} : memref<128x128xf32, #tpu.memory_space<vmem>>, vector<128x128xf32>,
    return
  }
  func.func @transform_0(%arg0: i32) -> (i32, i32) {
    %c0_i32 = arith.constant 0 : i32
    %c0_i32_0 = arith.constant 0 : i32
    return %arg0, %c0_i32 : i32, i32
  }
  func.func @transform_1(%arg0: i32) -> (i32, i32) {
    %c0_i32 = arith.constant 0 : i32
    %c0_i32_0 = arith.constant 0 : i32
    %c0_i32_1 = arith.constant 0 : i32
    return %c0_i32, %c0_i32_0 : i32, i32
  }
  func.func @transform_2(%arg0: i32) -> (i32, i32) {
    %c0_i32 = arith.constant 0 : i32
    %c0_i32_0 = arith.constant 0 : i32
    %c0_i32_1 = arith.constant 0 : i32
    return %c0_i32, %c0_i32_0 : i32, i32
  }
  func.func @transform_3(%arg0: i32) -> (i32, i32) {
    %c0_i32 = arith.constant 0 : i32
    %c0_i32_0 = arith.constant 0 : i32
    return %arg0, %c0_i32 : i32, i32
  }
}

</mosaic_0001>

<llo_original>
// kernel: tpu_custom_call.1
$region0: #{tpu_custom_call.1}
  #allocation0 [shape = 'u32[]', space=smem, size = 0x4, offset = 0x4, fixed_abs, tag = 'smem constant byte address 0x4 - core index']
  #allocation1 [shape = 'u32[144,128]{1,0:T(1,128)}', space=vmem, size = 0x12000, scoped, tag = 'internal scratch']
  %s0 = inlined_call_operand.hbm [shape: f32[128,128], index: 0, kind: input, shape index: {}]
  %s1 = inlined_call_operand.hbm [shape: f32[128,128], index: 1, kind: input, shape index: {}]
  %s2 = inlined_call_operand.vmem [shape: f32[1,128], index: 2, kind: input, shape index: {}]
  %s3 = inlined_call_operand.hbm [shape: f32[128,128], index: 3, kind: output, shape index: {}]
  %s4 = sld [smem:[#allocation0]]
  $region30: #{tpu_custom_call.1} parent=0
    _
  %s6 = ssub.s32 1, %s4
  %s7 = scalar_select 0, %s6, %s4
  $region1: #{tpu_custom_call.1} parent=0
    #allocation2 [shape = 'u8[65536]{0}', space=vmem, size = 0x10000, scoped, tag = 'input window, operand 0, single buffered']
    #allocation3 [shape = 's32[1]{0}', space=sflag, size = 0x4, scoped, tag = 'scoped memory for tpu_custom_call.1']
    #allocation4 [shape = 's32[1]{0}', space=sflag, size = 0x4, scoped, tag = 'scoped memory for tpu_custom_call.1']
    #allocation5 [shape = 'u8[65536]{0}', space=vmem, size = 0x10000, scoped, tag = 'input window, operand 1, single buffered']
    #allocation6 [shape = 's32[1]{0}', space=sflag, size = 0x4, scoped, tag = 'scoped memory for tpu_custom_call.1']
    #allocation7 [shape = 'u8[65536]{0}', space=vmem, size = 0x10000, scoped, tag = 'output window, operand 0, single buffered']
    %8 = vsyncpa [#allocation3], 0
    %9 = vsyncpa [#allocation6], 0
    %10 = vsyncpa [#allocation4], 0
    // Predicated region
    $region2: #{tpu_custom_call.1} parent=1 // pred_check
      _
    $region3: #{tpu_custom_call.1} parent=1 // pred_check_branch
      %12 = sbr.rel (0) target = $region5
    $region4: #{tpu_custom_call.1} parent=1 // pred_region
      %s14 = ssub.s32 2048, 2048
      %15 = vsyncadd [#allocation3], %s14
      %s16 = sshll.u32 [#allocation2], 4
      %s17 = int_to_ptr.vmem [resolvable:$true] %s16
      %22 = dma.hbm_to_vmem [thread:$0]  %s0, 2048, %s17, [#allocation3], 128, 128, 8
    $region5: #{tpu_custom_call.1} parent=1 // pred_fallthru
      _
    // Predicated region
    $region6: #{tpu_custom_call.1} parent=1 // pred_check
      _
    $region7: #{tpu_custom_call.1} parent=1 // pred_check_branch
      %24 = sbr.rel (0) target = $region9
    $region8: #{tpu_custom_call.1} parent=1 // pred_region
      %s26 = ssub.s32 2048, 2048
      %27 = vsyncadd [#allocation6], %s26
      %s28 = sshll.u32 [#allocation5], 4
      %s29 = int_to_ptr.vmem [resolvable:$true] %s28
      %34 = dma.hbm_to_vmem [thread:$0]  %s1, 2048, %s29, [#allocation6], 128, 128, 8
    $region9: #{tpu_custom_call.1} parent=1 // pred_fallthru
      _
    // Predicated region
    $region10: #{tpu_custom_call.1} parent=1 // pred_check
      _
    $region11: #{tpu_custom_call.1} parent=1 // pred_check_branch
      %36 = sbr.rel (0) target = $region13
    $region12: #{tpu_custom_call.1} parent=1 // pred_region
      _
    $region13: #{tpu_custom_call.1} parent=1 // pred_fallthru
      _
    // Predicated region
    $region14: #{tpu_custom_call.1} parent=1 // pred_check
      _
    $region15: #{tpu_custom_call.1} parent=1 // pred_check_branch
      %38 = sbr.rel (0) target = $region17
    $region16: #{tpu_custom_call.1} parent=1 // pred_region
      %39 = dma.done [#allocation3], 2048
    $region17: #{tpu_custom_call.1} parent=1 // pred_fallthru
      _
    // Predicated region
    $region18: #{tpu_custom_call.1} parent=1 // pred_check
      _
    $region19: #{tpu_custom_call.1} parent=1 // pred_check_branch
      %41 = sbr.rel (0) target = $region21
    $region20: #{tpu_custom_call.1} parent=1 // pred_region
      %42 = dma.done [#allocation6], 2048
    $region21: #{tpu_custom_call.1} parent=1 // pred_fallthru
      _
    %v43 = vld [vmem:[#allocation2] sm:$0xff]
    %v44 = vld [vmem:[#allocation2 + $0x8] sm:$0xff]
    %v45 = vld [vmem:[#allocation2 + $0x10] sm:$0xff]
    %v46 = vld [vmem:[#allocation2 + $0x18] sm:$0xff]
    %v47 = vld [vmem:[#allocation2 + $0x20] sm:$0xff]
    %v48 = vld [vmem:[#allocation2 + $0x28] sm:$0xff]
    %v49 = vld [vmem:[#allocation2 + $0x30] sm:$0xff]
    %v50 = vld [vmem:[#allocation2 + $0x38] sm:$0xff]
    %v51 = vld [vmem:[#allocation2 + $0x40] sm:$0xff]
    %v52 = vld [vmem:[#allocation2 + $0x48] sm:$0xff]
    %v53 = vld [vmem:[#allocation2 + $0x50] sm:$0xff]
    %v54 = vld [vmem:[#allocation2 + $0x58] sm:$0xff]
    %v55 = vld [vmem:[#allocation2 + $0x60] sm:$0xff]
    %v56 = vld [vmem:[#allocation2 + $0x68] sm:$0xff]
    %v57 = vld [vmem:[#allocation2 + $0x70] sm:$0xff]
    %v58 = vld [vmem:[#allocation2 + $0x78] sm:$0xff]
    %v59 = vld [vmem:[#allocation5] sm:$0xff]
    %v60 = vld [vmem:[#allocation5 + $0x8] sm:$0xff]
    %v61 = vld [vmem:[#allocation5 + $0x10] sm:$0xff]
    %v62 = vld [vmem:[#allocation5 + $0x18] sm:$0xff]
    %v63 = vld [vmem:[#allocation5 + $0x20] sm:$0xff]
    %v64 = vld [vmem:[#allocation5 + $0x28] sm:$0xff]
    %v65 = vld [vmem:[#allocation5 + $0x30] sm:$0xff]
    %v66 = vld [vmem:[#allocation5 + $0x38] sm:$0xff]
    %v67 = vld [vmem:[#allocation5 + $0x40] sm:$0xff]
    %v68 = vld [vmem:[#allocation5 + $0x48] sm:$0xff]
    %v69 = vld [vmem:[#allocation5 + $0x50] sm:$0xff]
    %v70 = vld [vmem:[#allocation5 + $0x58] sm:$0xff]
    %v71 = vld [vmem:[#allocation5 + $0x60] sm:$0xff]
    %v72 = vld [vmem:[#allocation5 + $0x68] sm:$0xff]
    %v73 = vld [vmem:[#allocation5 + $0x70] sm:$0xff]
    %v74 = vld [vmem:[#allocation5 + $0x78] sm:$0xff]
    %v75 = vld [vmem:[%s2] sm:$0x1]
    %v77 = vlaneseq
    %v78 = vshrl.u32 %v77, 7
    %v79 = vsub.s32 0, %v78
    %v80 = vrot.slane %v75, %v79
    %82 = vmatprep.subr.mxu0 0.0
    %83 = vmatpush1.msra.mxu0 %v74
    %84 = vmatprep.subr.mxu0 0.0
    %85 = vmatpush1.msra.mxu0 %v73
    %86 = vmatprep.subr.mxu0 0.0
    %87 = vmatpush1.msra.mxu0 %v72
    %88 = vmatprep.subr.mxu0 0.0
    %89 = vmatpush1.msra.mxu0 %v71
    %90 = vmatprep.subr.mxu0 0.0
    %91 = vmatpush1.msra.mxu0 %v70
    %92 = vmatprep.subr.mxu0 0.0
    %93 = vmatpush1.msra.mxu0 %v69
    %94 = vmatprep.subr.mxu0 0.0
    %95 = vmatpush1.msra.mxu0 %v68
    %96 = vmatprep.subr.mxu0 0.0
    %97 = vmatpush1.msra.mxu0 %v67
    %98 = vmatprep.subr.mxu0 0.0
    %99 = vmatpush1.msra.mxu0 %v66
    %100 = vmatprep.subr.mxu0 0.0
    %101 = vmatpush1.msra.mxu0 %v65
    %102 = vmatprep.subr.mxu0 0.0
    %103 = vmatpush1.msra.mxu0 %v64
    %104 = vmatprep.subr.mxu0 0.0
    %105 = vmatpush1.msra.mxu0 %v63
    %106 = vmatprep.subr.mxu0 0.0
    %107 = vmatpush1.msra.mxu0 %v62
    %108 = vmatprep.subr.mxu0 0.0
    %109 = vmatpush1.msra.mxu0 %v61
    %110 = vmatprep.subr.mxu0 0.0
    %111 = vmatpush1.msra.mxu0 %v60
    %112 = vmatprep.subr.mxu0 0.0
    %113 = vmatpush1.msra.mxu0 %v59
    %114 = vmatprep.subr.mxu0 0.0
    %115 = vmatpush2.msra.mxu0 0.0
    %116 = vmatprep.subr.mxu0 0.0
    %117 = vmatpush2.msra.mxu0 0.0
    %118 = vmatprep.subr.mxu0 0.0
    %119 = vmatpush2.msra.mxu0 0.0
    %120 = vmatprep.subr.mxu0 0.0
    %121 = vmatpush2.msra.mxu0 0.0
    %122 = vmatprep.subr.mxu0 0.0
    %123 = vmatpush2.msra.mxu0 0.0
    %124 = vmatprep.subr.mxu0 0.0
    %125 = vmatpush2.msra.mxu0 0.0
    %126 = vmatprep.subr.mxu0 0.0
    %127 = vmatpush2.msra.mxu0 0.0
    %128 = vmatprep.subr.mxu0 0.0
    %129 = vmatpush2.msra.mxu0 0.0
    %130 = vmatprep.subr.mxu0 0.0
    %131 = vmatpush2.msra.mxu0 0.0
    %132 = vmatprep.subr.mxu0 0.0
    %133 = vmatpush2.msra.mxu0 0.0
    %134 = vmatprep.subr.mxu0 0.0
    %135 = vmatpush2.msra.mxu0 0.0
    %136 = vmatprep.subr.mxu0 0.0
    %137 = vmatpush2.msra.mxu0 0.0
    %138 = vmatprep.subr.mxu0 0.0
    %139 = vmatpush2.msra.mxu0 0.0
    %140 = vmatprep.subr.mxu0 0.0
    %141 = vmatpush2.msra.mxu0 0.0
    %142 = vmatprep.subr.mxu0 0.0
    %143 = vmatpush2.msra.mxu0 0.0
    %144 = vmatprep.subr.mxu0 0.0
    %145 = vmatpush2.msra.mxu0 0.0
    %146 = vmatprep.mubr.f32.mxu0 0.0
    %147 = vmatmul.mubr.f32.gmra.mxu0 %v43
    %v148 = vpop.f32.mrf.mxu0
    %v149 = vadd.f32 %v80, %v148
    %v150 = vpop.f32.mrf.mxu0
    %151 = vmatprep.mubr.f32.mxu0 0.0
    %152 = vmatmul.mubr.f32.gmra.mxu0 %v44
    %v153 = vpop.f32.mrf.mxu0
    %v154 = vadd.f32 %v80, %v153
    %v155 = vpop.f32.mrf.mxu0
    %156 = vmatprep.mubr.f32.mxu0 0.0
    %157 = vmatmul.mubr.f32.gmra.mxu0 %v45
    %v158 = vpop.f32.mrf.mxu0
    %v159 = vadd.f32 %v80, %v158
    %v160 = vpop.f32.mrf.mxu0
    %161 = vmatprep.mubr.f32.mxu0 0.0
    %162 = vmatmul.mubr.f32.gmra.mxu0 %v46
    %v163 = vpop.f32.mrf.mxu0
    %v164 = vadd.f32 %v80, %v163
    %v165 = vpop.f32.mrf.mxu0
    %166 = vmatprep.mubr.f32.mxu0 0.0
    %167 = vmatmul.mubr.f32.gmra.mxu0 %v47
    %v168 = vpop.f32.mrf.mxu0
    %v169 = vadd.f32 %v80, %v168
    %v170 = vpop.f32.mrf.mxu0
    %171 = vmatprep.mubr.f32.mxu0 0.0
    %172 = vmatmul.mubr.f32.gmra.mxu0 %v48
    %v173 = vpop.f32.mrf.mxu0
    %v174 = vadd.f32 %v80, %v173
    %v175 = vpop.f32.mrf.mxu0
    %176 = vmatprep.mubr.f32.mxu0 0.0
    %177 = vmatmul.mubr.f32.gmra.mxu0 %v49
    %v178 = vpop.f32.mrf.mxu0
    %v179 = vadd.f32 %v80, %v178
    %v180 = vpop.f32.mrf.mxu0
    %181 = vmatprep.mubr.f32.mxu0 0.0
    %182 = vmatmul.mubr.f32.gmra.mxu0 %v50
    %v183 = vpop.f32.mrf.mxu0
    %v184 = vadd.f32 %v80, %v183
    %v185 = vpop.f32.mrf.mxu0
    %186 = vmatprep.mubr.f32.mxu0 0.0
    %187 = vmatmul.mubr.f32.gmra.mxu0 %v51
    %v188 = vpop.f32.mrf.mxu0
    %v189 = vadd.f32 %v80, %v188
    %v190 = vpop.f32.mrf.mxu0
    %191 = vmatprep.mubr.f32.mxu0 0.0
    %192 = vmatmul.mubr.f32.gmra.mxu0 %v52
    %v193 = vpop.f32.mrf.mxu0
    %v194 = vadd.f32 %v80, %v193
    %v195 = vpop.f32.mrf.mxu0
    %196 = vmatprep.mubr.f32.mxu0 0.0
    %197 = vmatmul.mubr.f32.gmra.mxu0 %v53
    %v198 = vpop.f32.mrf.mxu0
    %v199 = vadd.f32 %v80, %v198
    %v200 = vpop.f32.mrf.mxu0
    %201 = vmatprep.mubr.f32.mxu0 0.0
    %202 = vmatmul.mubr.f32.gmra.mxu0 %v54
    %v203 = vpop.f32.mrf.mxu0
    %v204 = vadd.f32 %v80, %v203
    %v205 = vpop.f32.mrf.mxu0
    %206 = vmatprep.mubr.f32.mxu0 0.0
    %207 = vmatmul.mubr.f32.gmra.mxu0 %v55
    %v208 = vpop.f32.mrf.mxu0
    %v209 = vadd.f32 %v80, %v208
    %v210 = vpop.f32.mrf.mxu0
    %211 = vmatprep.mubr.f32.mxu0 0.0
    %212 = vmatmul.mubr.f32.gmra.mxu0 %v56
    %v213 = vpop.f32.mrf.mxu0
    %v214 = vadd.f32 %v80, %v213
    %v215 = vpop.f32.mrf.mxu0
    %216 = vmatprep.mubr.f32.mxu0 0.0
    %217 = vmatmul.mubr.f32.gmra.mxu0 %v57
    %v218 = vpop.f32.mrf.mxu0
    %v219 = vadd.f32 %v80, %v218
    %v220 = vpop.f32.mrf.mxu0
    %221 = vmatprep.mubr.f32.mxu0 0.0
    %222 = vmatmul.mubr.f32.gmra.mxu0 %v58
    %v223 = vpop.f32.mrf.mxu0
    %v224 = vadd.f32 %v80, %v223
    %v225 = vpop.f32.mrf.mxu0
    %226 = vdwg.mxu0
    %227 = vst [vmem:[#allocation7] sm:$0xff] %v149
    %228 = vst [vmem:[#allocation7 + $0x8] sm:$0xff] %v154
    %229 = vst [vmem:[#allocation7 + $0x10] sm:$0xff] %v159
    %230 = vst [vmem:[#allocation7 + $0x18] sm:$0xff] %v164
    %231 = vst [vmem:[#allocation7 + $0x20] sm:$0xff] %v169
    %232 = vst [vmem:[#allocation7 + $0x28] sm:$0xff] %v174
    %233 = vst [vmem:[#allocation7 + $0x30] sm:$0xff] %v179
    %234 = vst [vmem:[#allocation7 + $0x38] sm:$0xff] %v184
    %235 = vst [vmem:[#allocation7 + $0x40] sm:$0xff] %v189
    %236 = vst [vmem:[#allocation7 + $0x48] sm:$0xff] %v194
    %237 = vst [vmem:[#allocation7 + $0x50] sm:$0xff] %v199
    %238 = vst [vmem:[#allocation7 + $0x58] sm:$0xff] %v204
    %239 = vst [vmem:[#allocation7 + $0x60] sm:$0xff] %v209
    %240 = vst [vmem:[#allocation7 + $0x68] sm:$0xff] %v214
    %241 = vst [vmem:[#allocation7 + $0x70] sm:$0xff] %v219
    %242 = vst [vmem:[#allocation7 + $0x78] sm:$0xff] %v224
    // Predicated region
    $region22: #{tpu_custom_call.1} parent=1 // pred_check
      _
    $region23: #{tpu_custom_call.1} parent=1 // pred_check_branch
      %244 = sbr.rel (0) target = $region25
    $region24: #{tpu_custom_call.1} parent=1 // pred_region
      %s246 = ssub.s32 2048, 2048
      %247 = vsyncadd [#allocation4], %s246
      %s248 = sshll.u32 [#allocation7], 4
      %s249 = int_to_ptr.vmem [resolvable:$true] %s248
      %254 = dma.vmem_to_hbm [thread:$0]  %s249, 2048, %s3, [#allocation4], 128, 128, 8
    $region25: #{tpu_custom_call.1} parent=1 // pred_fallthru
      _
    // Predicated region
    $region26: #{tpu_custom_call.1} parent=1 // pred_check
      _
    $region27: #{tpu_custom_call.1} parent=1 // pred_check_branch
      %256 = sbr.rel (0) target = $region29
    $region28: #{tpu_custom_call.1} parent=1 // pred_region
      %257 = dma.done [#allocation4], 2048
    $region29: #{tpu_custom_call.1} parent=1 // pred_fallthru
      _
    %258 = vsyncpa [#allocation3], 1
    %259 = vsyncpa [#allocation6], 1
    %260 = vsyncpa [#allocation4], 1

</llo_original>
